<compile_context>
chip_gen: v7x
topology: tpu7x:2x2x1
jax: 0.10.0
libtpu: 0.0.40
codegen_flags: <defaults>
</compile_context>

<pallas_src>
import functools

import jax
import jax.numpy as jnp
from jax.experimental import pallas as pl
from jax.experimental.pallas import tpu as pltpu


def _round_up(x, m):
    return ((x + m - 1) // m) * m


def _vmem_capacity_bytes():
    """Physical per-core VMEM; conservative 64 MiB (v7x) if the query fails."""
    try:
        cap = getattr(pltpu.get_tpu_info(), "vmem_capacity_bytes", None)
        if cap:
            return int(cap)
    except Exception:
        pass
    return 64 << 20


def _choose_tm(m, k, n, in_bytes, out_bytes, vmem_cap):
    """Largest M tile whose streamed traffic fits the VMEM budget, >= 2 steps."""
    if m <= 8:
        return m
    # Streaming budget: a fraction of VMEM minus the resident weight (counted
    # twice to stay safe even if single-buffering were ignored).
    budget = max(int(vmem_cap * 0.55) - 2 * k * n * in_bytes, 2 << 20)
    per_row = 2 * (k * in_bytes + n * out_bytes)        # double-buffered in+out
    max_tm = 2048 if vmem_cap >= (96 << 20) else 1024   # 128 MiB parts vs v7x
    tm = int(min(budget // per_row, max_tm, m))
    # Guarantee >= 2 grid steps so ("parallel",) splits M over v7x's 2 TCs.
    tm = min(tm, _round_up(-(-m // 2), 8))
    if tm >= 256:
        tm = (tm // 256) * 256       # fill the 256x256 MXU on v6e/v7x
    else:
        tm = max(8, (tm // 8) * 8)   # sublane granularity
    return tm


def patch_embed_kernel(x_ref, w_ref, b_ref, o_ref):
    # (tm, K) @ (K, E) on the MXU, f32 accumulation, f32 bias add, cast on store.
    acc = jnp.dot(x_ref[...], w_ref[...], preferred_element_type=jnp.float32)
    o_ref[...] = (acc + b_ref[...]).astype(o_ref.dtype)


@functools.partial(
    jax.jit,
    static_argnames=("patch_size", "flatten", "compute_dtype", "out_dtype"))
def patch_embed_2d(x, weight, bias, *, patch_size, flatten=True,
                   compute_dtype=None, out_dtype=None):
    """x: (B, C, H, W); weight: (E, C, p, p) [PyTorch OIHW]; bias: (E,)."""
    B, C, H, W = x.shape
    E = weight.shape[0]
    p = patch_size
    GH, GW = H // p, W // p
    num_patches = GH * GW

    out_dt = jnp.dtype(out_dtype) if out_dtype is not None else jnp.dtype(x.dtype)
    if compute_dtype is not None:
        x = x.astype(compute_dtype)          # cast fused into the extraction copy
        weight = weight.astype(compute_dtype)

    # --- glue: non-overlapping patch extraction (one fused XLA transpose pass) ---
    # TODO(synk): fold the extraction into the kernel (block x per (b, patch-row) and relayout (C,p,GW,p)->(GW,K) in VMEM) once Mosaic reliably lowers that reshape/transpose.
    patches = x.reshape(B, C, GH, p, GW, p)
    patches = patches.transpose(0, 2, 4, 1, 3, 5)          # (B, GH, GW, C, p, p)
    patches = patches.reshape(B * num_patches, C * p * p)  # contraction (c, kh, kw)
    w2d = weight.reshape(E, C * p * p).T                   # (K, E), same order
    b2d = bias.reshape(1, E).astype(jnp.float32)

    M, K = patches.shape
    in_bytes = patches.dtype.itemsize
    out_bytes = out_dt.itemsize

    # Zero-pad K to the sublane tile (8 f32 / 16 bf16): unragged weight/MXU feed.
    ktile = 8 * max(1, 4 // in_bytes)
    K_pad = _round_up(K, ktile)
    if K_pad != K:
        patches = jnp.pad(patches, ((0, 0), (0, K_pad - K)))
        w2d = jnp.pad(w2d, ((0, K_pad - K), (0, 0)))

    vmem_cap = _vmem_capacity_bytes()
    tm = _choose_tm(M, K_pad, E, in_bytes, out_bytes, vmem_cap)
    grid = (pl.cdiv(M, tm),)   # ragged last tile handled by Pallas; no M padding

    # VMEM: double-buffered streamed tiles + resident weight/bias (+ headroom),
    # capped at ~72% of physical VMEM (compiler scratch headroom on v7x's 64 MiB).
    vmem_needed = (2 * tm * (K_pad * in_bytes + E * out_bytes)
                   + 2 * K_pad * E * in_bytes + 2 * E * 4)
    vmem_limit = int(vmem_needed * 3 // 2) + (4 << 20)
    vmem_limit = min(max(vmem_limit, 16 << 20), int(vmem_cap * 0.72))

    cost = pl.CostEstimate(
        flops=2 * M * K_pad * E,
        transcendentals=0,
        bytes_accessed=(M * K_pad * in_bytes + K_pad * E * in_bytes
                        + E * 4 + M * E * out_bytes),
    )

    out = pl.pallas_call(
        patch_embed_kernel,
        out_shape=jax.ShapeDtypeStruct((M, E), out_dt),
        grid=grid,
        in_specs=[
            # Streamed patch tiles (default double-buffered pipeline).
            pl.BlockSpec((tm, K_pad), lambda i: (i, 0)),
            # Weight / bias: constant index_map -> DMA'd once, single VMEM copy.
            pl.BlockSpec((K_pad, E), lambda i: (0, 0),
                         pipeline_mode=pl.Buffered(1)),
            pl.BlockSpec((1, E), lambda i: (0, 0),
                         pipeline_mode=pl.Buffered(1)),
        ],
        out_specs=pl.BlockSpec((tm, E), lambda i: (i, 0)),
        compiler_params=pltpu.CompilerParams(
            dimension_semantics=("parallel",),   # shard the M loop over v7x's 2 TCs
            vmem_limit_bytes=vmem_limit,
        ),
        cost_estimate=cost,
    )(patches, w2d, b2d)

    out = out.reshape(B, num_patches, E)         # free: pure metadata reshape
    if not flatten:
        out = out.reshape(B, GH, GW, E).transpose(0, 3, 1, 2)  # (B, E, GH, GW)
    # norm_layer=None -> Identity (nothing to do)
    return out


def _reference(x, weight, bias, patch_size):
    """Pure-JAX reference replicating nn.Conv2d(stride=kernel=p) + flatten/transpose."""
    p = patch_size
    y = jax.lax.conv_general_dilated(
        x.astype(jnp.float32),
        weight.astype(jnp.float32),
        window_strides=(p, p),
        padding="VALID",
        dimension_numbers=("NCHW", "OIHW", "NCHW"),
    )
    y = y + bias.reshape(1, -1, 1, 1)
    B, E, GH, GW = y.shape
    return y.reshape(B, E, GH * GW).transpose(0, 2, 1)


if __name__ == "__main__":
    # Small shapes consistent with the module:
    # img_size=(16,16), patch_size=4, in_chans=4, embed_dim=32, batch=2
    B, C, H, W = 2, 4, 16, 16
    p = 4
    E = 32

    key = jax.random.PRNGKey(0)
    kx, kw, kb = jax.random.split(key, 3)
    x = jax.random.normal(kx, (B, C, H, W), dtype=jnp.float32)
    weight = jax.random.normal(kw, (E, C, p, p), dtype=jnp.float32) * 0.02
    bias = jax.random.normal(kb, (E,), dtype=jnp.float32) * 0.02

    ref = _reference(x, weight, bias, patch_size=p)

    # f32 path: matches the PyTorch module's numerics.
    out = patch_embed_2d(x, weight, bias, patch_size=p, flatten=True)
    out = jax.block_until_ready(out)
    assert out.shape == (B, (H // p) * (W // p), E), out.shape
    assert jnp.allclose(out, ref, atol=2e-4, rtol=2e-4), "f32 mismatch vs reference"

    # bf16 operands + bf16 stores (bandwidth-friendly); f32 accumulation retained.
    out_bf16 = patch_embed_2d(x, weight, bias, patch_size=p, flatten=True,
                              compute_dtype=jnp.bfloat16, out_dtype=jnp.bfloat16)
    out_bf16 = jax.block_until_ready(out_bf16)
    assert out_bf16.dtype == jnp.bfloat16
    assert jnp.allclose(out_bf16.astype(jnp.float32), ref, atol=3e-2, rtol=3e-2), \
        "bf16 mismatch vs reference"

    # flatten=False path: (B, E, GH, GW), same as the module without flattening.
    out_nf = patch_embed_2d(x, weight, bias, patch_size=p, flatten=False)
    out_nf = jax.block_until_ready(out_nf)
    assert out_nf.shape == (B, E, H // p, W // p), out_nf.shape

    print("KERNEL_OK")
</pallas_src>

<mosaic_0001>
module attributes {stable_mosaic.version = 11 : i64} {
  func.func @patch_embed_kernel(%arg0: i32, %arg1: memref<16x64xf32, #tpu.memory_space<vmem>>, %arg2: memref<64x32xf32, #tpu.memory_space<vmem>>, %arg3: memref<1x32xf32, #tpu.memory_space<vmem>>, %arg4: memref<16x32xf32, #tpu.memory_space<vmem>>) attributes {dimension_semantics = [#tpu.dimension_semantics<parallel>], iteration_bounds = array<i64: 2>, scalar_prefetch = 0 : i64, scratch_operands = 0 : i64, tpu.core_type = #tpu.core_type<tc>, window_params = [{transform_indices = @transform_0, window_bounds = array<i64: 16, 64>}, {pipeline_mode = #tpu.pipeline_mode<synchronous>, transform_indices = @transform_1, window_bounds = array<i64: 64, 32>}, {pipeline_mode = #tpu.pipeline_mode<synchronous>, transform_indices = @transform_2, window_bounds = array<i64: 1, 32>}, {transform_indices = @transform_3, window_bounds = array<i64: 16, 32>}]} {
    %c0 = arith.constant 0 : index
    %c0_0 = arith.constant 0 : index
    %0 = vector.load %arg1[%c0, %c0_0] : memref<16x64xf32, #tpu.memory_space<vmem>>, vector<16x64xf32>
    %c0_1 = arith.constant 0 : index
    %c0_2 = arith.constant 0 : index
    %1 = vector.load %arg2[%c0_1, %c0_2] : memref<64x32xf32, #tpu.memory_space<vmem>>, vector<64x32xf32>
    %cst = arith.constant dense<0.000000e+00> : vector<16x32xf32>
    %2 = tpu.matmul %0, %1, %cst {dimension_numbers = #tpu.dot_dimension_numbers<[1], [0], [0], [1], [0, 0, 1, 1], [], []>} : vector<16x64xf32>, vector<64x32xf32>, vector<16x32xf32> -> vector<16x32xf32>
    %c0_3 = arith.constant 0 : index
    %c0_4 = arith.constant 0 : index
    %3 = vector.load %arg3[%c0_3, %c0_4] : memref<1x32xf32, #tpu.memory_space<vmem>>, vector<1x32xf32>
    %4 = vector.broadcast %3 : vector<1x32xf32> to vector<16x32xf32>
    %5 = arith.addf %2, %4 : vector<16x32xf32>
    %c0_5 = arith.constant 0 : index
    %c0_6 = arith.constant 0 : index
    %6 = vector.load %arg4[%c0_5, %c0_6] : memref<16x32xf32, #tpu.memory_space<vmem>>, vector<16x32xf32>
    tpu.vector_store %arg4[%c0_5, %c0_6], %5 {strides = array<i32>} : memref<16x32xf32, #tpu.memory_space<vmem>>, vector<16x32xf32>,
    return
  }
  func.func @transform_0(%arg0: i32) -> (i32, i32) {
    %c0_i32 = arith.constant 0 : i32
    %c0_i32_0 = arith.constant 0 : i32
    return %arg0, %c0_i32 : i32, i32
  }
  func.func @transform_1(%arg0: i32) -> (i32, i32) {
    %c0_i32 = arith.constant 0 : i32
    %c0_i32_0 = arith.constant 0 : i32
    %c0_i32_1 = arith.constant 0 : i32
    return %c0_i32, %c0_i32_0 : i32, i32
  }
  func.func @transform_2(%arg0: i32) -> (i32, i32) {
    %c0_i32 = arith.constant 0 : i32
    %c0_i32_0 = arith.constant 0 : i32
    %c0_i32_1 = arith.constant 0 : i32
    return %c0_i32, %c0_i32_0 : i32, i32
  }
  func.func @transform_3(%arg0: i32) -> (i32, i32) {
    %c0_i32 = arith.constant 0 : i32
    %c0_i32_0 = arith.constant 0 : i32
    return %arg0, %c0_i32 : i32, i32
  }
}

</mosaic_0001>

<llo_original>
// kernel: patch_embed_2d.1
$region0: #{patch_embed_2d.1}
  #allocation0 [shape = 'u32[]', space=smem, size = 0x4, offset = 0x4, fixed_abs, tag = 'smem constant byte address 0x4 - core index']
  #allocation1 [shape = 'u32[144,128]{1,0:T(1,128)}', space=vmem, size = 0x12000, scoped, tag = 'internal scratch']
  %s0 = inlined_call_operand.vmem [shape: f32[32,64], index: 0, kind: input, shape index: {}]
  %s1 = inlined_call_operand.vmem [shape: f32[64,32], index: 1, kind: input, shape index: {}]
  %s2 = inlined_call_operand.vmem [shape: f32[1,32], index: 2, kind: input, shape index: {}]
  %s3 = inlined_call_operand.hbm [shape: f32[32,32], index: 3, kind: output, shape index: {}]
  %s4 = sld [smem:[#allocation0]]
  $region45: #{patch_embed_2d.1} parent=0
    _
  %s6 = ssub.s32 1, %s4
  %s7 = scalar_select 0, %s6, %s4
  $region1: #{patch_embed_2d.1} parent=0
    #allocation2 [shape = 'u8[16384]{0}', space=vmem, size = 0x4000, scoped, tag = 'output window, operand 0']
    #allocation3 [shape = 's32[2]{0}', space=sflag, size = 0x8, scoped, tag = 'scoped memory for patch_embed_2d.1']
    %8 = vsyncpa [#allocation3], 0
    %s9 = scalar_lea.sflag [#allocation3], 1
    %10 = vsyncpa %s9, 0
    loop: start=0, step=1, limit=4
    $region2: #{patch_embed_2d.1} parent=1 // loop_pre_header
      _
    $region3: #{patch_embed_2d.1} parent=1 // loop_header
      %s12 = sphi 0, %s16
      %p13 = scmp.ge.s32.totalorder %s12, 4
      %s22 = sphi 0, %s24
      %s25 = sphi 0, %s22
      %s26 = sphi 0, %s25
      %s42 = sphi 0, %s26
      %s46 = sphi 0, %s46
      %s48 = sphi 0, %s46
      %s49 = sphi 0, %s48
      %s63 = sphi 0, %s49
      %s67 = sphi 0, %s67
      %s69 = sphi 0, %s67
      %s70 = sphi 0, %s69
      %s84 = sphi 0, %s70
      %s90 = sphi 0, %s92
      %s93 = sphi 0, %s90
      %s94 = sphi 0, %s93
      %s110 = sphi 0, %s94
    $region4: #{patch_embed_2d.1} parent=1 // loop_header_branch
      %15 = sbr.rel (%p13) target = $region8
    $region5: #{patch_embed_2d.1} parent=1 // loop_body
      %s17 = ssub.s32 %s12, 1
      %s18 = ssub.s32 %s12, 2
      %s19 = sadd.s32 %s12, 1
      %s20 = ssub.s32 %s12, %s19
      %p21 = scmp.eq.s32.totalorder %s20, 0
      %s23 = sadd.s32 %s22, 1
      %s24 = scalar_select %p21, %s22, %s23
      %p27 = pneg %p21
      %p28 = scmp.eq.s32.totalorder %s12, 1
      %p29 = por %p27, %p28
      %p30 = scmp.ne.s32.totalorder %s22, %s25
      %p31 = scmp.eq.s32.totalorder %s12, 0
      %p32 = por %p30, %p31
      %p33 = scmp.ne.s32.totalorder %s22, %s25
      %p34 = scmp.eq.s32.totalorder %s17, 1
      %p35 = por %p33, %p34
      %p36 = scmp.ne.s32.totalorder %s25, %s26
      %p37 = scmp.eq.s32.totalorder %s17, 0
      %p38 = por %p36, %p37
      %p39 = scmp.ne.s32.totalorder %s25, %s26
      %p40 = scmp.eq.s32.totalorder %s18, 1
      %p41 = por %p39, %p40
      %p43 = scmp.ne.s32.totalorder %s26, %s42
      %p44 = scmp.eq.s32.totalorder %s18, 0
      %p45 = por %p43, %p44
      %s47 = sadd.s32 %s46, 1
      %p50 = scmp.eq.s32.totalorder %s12, 1
      %p51 = scmp.ne.s32.totalorder %s46, %s48
      %p52 = scmp.eq.s32.totalorder %s12, 0
      %p53 = por %p51, %p52
      %p54 = scmp.ne.s32.totalorder %s46, %s48
      %p55 = scmp.eq.s32.totalorder %s17, 1
      %p56 = por %p54, %p55
      %p57 = scmp.ne.s32.totalorder %s48, %s49
      %p58 = scmp.eq.s32.totalorder %s17, 0
      %p59 = por %p57, %p58
      %p60 = scmp.ne.s32.totalorder %s48, %s49
      %p61 = scmp.eq.s32.totalorder %s18, 1
      %p62 = por %p60, %p61
      %p64 = scmp.ne.s32.totalorder %s49, %s63
      %p65 = scmp.eq.s32.totalorder %s18, 0
      %p66 = por %p64, %p65
      %s68 = sadd.s32 %s67, 1
      %p71 = scmp.eq.s32.totalorder %s12, 1
      %p72 = scmp.ne.s32.totalorder %s67, %s69
      %p73 = scmp.eq.s32.totalorder %s12, 0
      %p74 = por %p72, %p73
      %p75 = scmp.ne.s32.totalorder %s67, %s69
      %p76 = scmp.eq.s32.totalorder %s17, 1
      %p77 = por %p75, %p76
      %p78 = scmp.ne.s32.totalorder %s69, %s70
      %p79 = scmp.eq.s32.totalorder %s17, 0
      %p80 = por %p78, %p79
      %p81 = scmp.ne.s32.totalorder %s69, %s70
      %p82 = scmp.eq.s32.totalorder %s18, 1
      %p83 = por %p81, %p82
      %p85 = scmp.ne.s32.totalorder %s70, %s84
      %p86 = scmp.eq.s32.totalorder %s18, 0
      %p87 = por %p85, %p86
      %s88 = ssub.s32 %s12, %s19
      %p89 = scmp.eq.s32.totalorder %s88, 0
      %s91 = sadd.s32 %s90, 1
      %s92 = scalar_select %p89, %s90, %s91
      %p95 = pneg %p89
      %p96 = scmp.eq.s32.totalorder %s12, 1
      %p97 = por %p95, %p96
      %p98 = scmp.ne.s32.totalorder %s90, %s93
      %p99 = scmp.eq.s32.totalorder %s12, 0
      %p100 = por %p98, %p99
      %p101 = scmp.ne.s32.totalorder %s90, %s93
      %p102 = scmp.eq.s32.totalorder %s17, 1
      %p103 = por %p101, %p102
      %p104 = scmp.ne.s32.totalorder %s93, %s94
      %p105 = scmp.eq.s32.totalorder %s17, 0
      %p106 = por %p104, %p105
      %p107 = scmp.ne.s32.totalorder %s93, %s94
      %p108 = scmp.eq.s32.totalorder %s18, 1
      %p109 = por %p107, %p108
      %p111 = scmp.ne.s32.totalorder %s94, %s110
      %p112 = scmp.eq.s32.totalorder %s18, 0
      %p113 = por %p111, %p112
      %p114 = scmp.le.s32.totalorder 1, %s12
      %p115 = scmp.lt.s32.totalorder %s12, 3
      %p116 = pnand %p114, %p115
      %p117 = pneg %p116
      // Predicated region
      $region9: #{patch_embed_2d.1} parent=5 // pred_check
        _
      $region10: #{patch_embed_2d.1} parent=5 // pred_check_branch
        %119 = sbr.rel (%p116) target = $region12
      $region11: #{patch_embed_2d.1} parent=5 // pred_region
        %s120 = ssub.s32 %s12, 1
        // Predicated region
        $region13: #{patch_embed_2d.1} parent=11 // pred_check
          %p121 = pneg %p59
        $region14: #{patch_embed_2d.1} parent=11 // pred_check_branch
          %123 = sbr.rel (%p121) target = $region16
        $region15: #{patch_embed_2d.1} parent=11 // pred_region
          _
        $region16: #{patch_embed_2d.1} parent=11 // pred_fallthru
          _
        // Predicated region
        $region17: #{patch_embed_2d.1} parent=11 // pred_check
          %p124 = pneg %p80
        $region18: #{patch_embed_2d.1} parent=11 // pred_check_branch
          %126 = sbr.rel (%p124) target = $region20
        $region19: #{patch_embed_2d.1} parent=11 // pred_region
          _
        $region20: #{patch_embed_2d.1} parent=11 // pred_fallthru
          _
      $region12: #{patch_embed_2d.1} parent=5 // pred_fallthru
        _
      %p127 = scmp.lt.s32.totalorder %s12, 2
      // Predicated region
      $region21: #{patch_embed_2d.1} parent=5 // pred_check
        %p128 = pneg %p127
      $region22: #{patch_embed_2d.1} parent=5 // pred_check_branch
        %130 = sbr.rel (%p128) target = $region24
      $region23: #{patch_embed_2d.1} parent=5 // pred_region
        // Predicated region
        $region25: #{patch_embed_2d.1} parent=23 // pred_check
          %p131 = pneg %p32
        $region26: #{patch_embed_2d.1} parent=23 // pred_check_branch
          %133 = sbr.rel (%p131) target = $region28
        $region27: #{patch_embed_2d.1} parent=23 // pred_region
          %s134 = smul.u32 2, %s12
          %p135 = scmp.lt.s32.totalorder %s134, 3
          %s136 = scalar_select %p135, %s134, 3
          %s137 = smul.addr %s136, 8
          %s138 = scalar_lea.vmem %s0, %s137
          %s139 = smul.u32 2, %s12
        $region28: #{patch_embed_2d.1} parent=23 // pred_fallthru
          _
      $region24: #{patch_embed_2d.1} parent=5 // pred_fallthru
        _
      %p140 = scmp.le.s32.totalorder 1, %s12
      %p141 = scmp.lt.s32.totalorder %s12, 3
      %p142 = pnand %p140, %p141
      %p143 = pneg %p142
      // Predicated region
      $region29: #{patch_embed_2d.1} parent=5 // pred_check
        _
      $region30: #{patch_embed_2d.1} parent=5 // pred_check_branch
        %145 = sbr.rel (%p142) target = $region32
      $region31: #{patch_embed_2d.1} parent=5 // pred_region
        %s146 = ssub.s32 %s12, 1
        %s147 = smul.u32 2, %s17
        %p148 = scmp.lt.s32.totalorder %s147, 3
        %s149 = scalar_select %p148, %s147, 3
        %s150 = smul.addr %s149, 8
        %s151 = scalar_lea.vmem %s0, %s150
        %p152 = pneg %p38
        %p153 = pneg %p35
        %p154 = pneg %p59
        %p155 = pneg %p56
        %p156 = pneg %p80
        %p157 = pneg %p77
        %p158 = pneg %p106
        %p159 = pneg %p103
        %s160 = sand.u32 %s93, 1
        %s161 = scalar_lea.sflag [#allocation3], %s160
        %s162 = sand.u32 %s93, 1
        %s163 = smul.addr %s162, 16
        %s164 = scalar_lea.vmem [#allocation2], %s163
        %s165 = smul.u32 2, %s17
        %p166 = scmp.lt.s32.totalorder %s165, 3
        %s167 = scalar_select %p166, %s165, 3
        %s168 = smul.addr %s167, 8
        %s169 = scalar_lea.vmem %s0, %s168
        %s170 = smul.u32 2, %s17
        %s171 = smul.u32 2, %s17
        %v172 = vld [vmem:[%s169] sm:$0xff]
        %v173 = vld [vmem:[%s169 + $0x8] sm:$0xff]
        %v174 = vld [vmem:[%s1] sm:$0xff]
        %v175 = vld [vmem:[%s1 + $0x8] sm:$0xff]
        %v176 = vld [vmem:[%s1 + $0x10] sm:$0xff]
        %v177 = vld [vmem:[%s1 + $0x18] sm:$0xff]
        %v178 = vld [vmem:[%s1 + $0x20] sm:$0xff]
        %v179 = vld [vmem:[%s1 + $0x28] sm:$0xff]
        %v180 = vld [vmem:[%s1 + $0x30] sm:$0xff]
        %v181 = vld [vmem:[%s1 + $0x38] sm:$0xff]
        %v182 = vld [vmem:[%s2] sm:$0x1]
        %v184 = vlaneseq
        %v185 = vshrl.u32 %v184, 7
        %v186 = vsub.s32 0, %v185
        %v187 = vrot.slane %v182, %v186
        %vm189 = vcmask 523264
        %v191 = vsel %vm189, %v172, 0
        %v194 = vsel %vm189, %v173, 0
        %196 = vmatprep.subr.mxu0 0.0
        %197 = vmatpush1.msra.mxu0 %v174
        %198 = vmatprep.subr.mxu0 0.0
        %199 = vmatpush1.msra.mxu0 %v175
        %200 = vmatprep.subr.mxu0 0.0
        %201 = vmatpush1.msra.mxu0 %v176
        %202 = vmatprep.subr.mxu0 0.0
        %203 = vmatpush1.msra.mxu0 %v177
        %204 = vmatprep.subr.mxu0 0.0
        %205 = vmatpush1.msra.mxu0 %v178
        %206 = vmatprep.subr.mxu0 0.0
        %207 = vmatpush1.msra.mxu0 %v179
        %208 = vmatprep.subr.mxu0 0.0
        %209 = vmatpush1.msra.mxu0 %v180
        %210 = vmatprep.subr.mxu0 0.0
        %211 = vmatpush1.msra.mxu0 %v181
        %212 = vmatprep.subr.mxu0 0.0
        %213 = vmatpush1.msra.mxu0 0.0
        %214 = vmatprep.subr.mxu0 0.0
        %215 = vmatpush1.msra.mxu0 0.0
        %216 = vmatprep.subr.mxu0 0.0
        %217 = vmatpush1.msra.mxu0 0.0
        %218 = vmatprep.subr.mxu0 0.0
        %219 = vmatpush1.msra.mxu0 0.0
        %220 = vmatprep.subr.mxu0 0.0
        %221 = vmatpush1.msra.mxu0 0.0
        %222 = vmatprep.subr.mxu0 0.0
        %223 = vmatpush1.msra.mxu0 0.0
        %224 = vmatprep.subr.mxu0 0.0
        %225 = vmatpush1.msra.mxu0 0.0
        %226 = vmatprep.subr.mxu0 0.0
        %227 = vmatpush1.msra.mxu0 0.0
        %228 = vmatprep.subr.mxu0 0.0
        %229 = vmatpush1.msra.mxu0 0.0
        %230 = vmatprep.subr.mxu0 0.0
        %231 = vmatpush1.msra.mxu0 0.0
        %232 = vmatprep.subr.mxu0 0.0
        %233 = vmatpush1.msra.mxu0 0.0
        %234 = vmatprep.subr.mxu0 0.0
        %235 = vmatpush1.msra.mxu0 0.0
        %236 = vmatprep.subr.mxu0 0.0
        %237 = vmatpush1.msra.mxu0 0.0
        %238 = vmatprep.subr.mxu0 0.0
        %239 = vmatpush1.msra.mxu0 0.0
        %240 = vmatprep.subr.mxu0 0.0
        %241 = vmatpush1.msra.mxu0 0.0
        %242 = vmatprep.subr.mxu0 0.0
        %243 = vmatpush1.msra.mxu0 0.0
        %244 = vmatprep.subr.mxu0 0.0
        %245 = vmatpush1.msra.mxu0 0.0
        %246 = vmatprep.subr.mxu0 0.0
        %247 = vmatpush1.msra.mxu0 0.0
        %248 = vmatprep.subr.mxu0 0.0
        %249 = vmatpush1.msra.mxu0 0.0
        %250 = vmatprep.subr.mxu0 0.0
        %251 = vmatpush1.msra.mxu0 0.0
        %252 = vmatprep.subr.mxu0 0.0
        %253 = vmatpush1.msra.mxu0 0.0
        %254 = vmatprep.subr.mxu0 0.0
        %255 = vmatpush1.msra.mxu0 0.0
        %256 = vmatprep.subr.mxu0 0.0
        %257 = vmatpush1.msra.mxu0 0.0
        %258 = vmatprep.subr.mxu0 0.0
        %259 = vmatpush1.msra.mxu0 0.0
        %260 = vmatprep.mubr.f32.mxu0 0.0
        %261 = vmatmul.mubr.f32.gmra.mrb[0].mxu0 %v191
        %v262 = vpop.f32.mrb[0].mxu0
        %v263 = vadd.f32 %v187, %v262
        %v264 = vpop.f32.mrb[0].mxu0
        %265 = vmatprep.mubr.f32.mxu0 0.0
        %266 = vmatmul.mubr.f32.gmra.mrb[0].mxu0 %v194
        %v267 = vpop.f32.mrb[0].mxu0
        %v268 = vadd.f32 %v187, %v267
        %v269 = vpop.f32.mrb[0].mxu0
        %270 = vdwg.mxu0
        %vm271 = vcmask 261120
        %272 = vst.msk [vmem:[%s164] sm:$0xff] %vm271, %v263
        %273 = vst.msk [vmem:[%s164 + $0x8] sm:$0xff] %vm271, %v268
        %s274 = sand.u32 %s93, 1
        %s275 = scalar_lea.sflag [#allocation3], %s274
        %s276 = sand.u32 %s93, 1
        %s277 = smul.addr %s276, 16
        %s278 = scalar_lea.vmem [#allocation2], %s277
        // Predicated region
        $region33: #{patch_embed_2d.1} parent=31 // pred_check
          %p279 = pneg %p103
        $region34: #{patch_embed_2d.1} parent=31 // pred_check_branch
          %281 = sbr.rel (%p279) target = $region36
        $region35: #{patch_embed_2d.1} parent=31 // pred_region
          %s282 = smul.u32 2, %s17
          %s284 = ssub.s32 256, 256
          %285 = vsyncadd %s275, %s284
          %s286 = smul.addr %s282, 128
          %s287 = scalar_lea.hbm %s3, %s286
          %s288 = sshll.u32 %s278, 4
          %s289 = int_to_ptr.vmem [resolvable:$true] %s288
          %294 = dma.vmem_to_hbm [thread:$0]  %s289, 256, %s287, %s275, 128, 128, 8
        $region36: #{patch_embed_2d.1} parent=31 // pred_fallthru
          _
      $region32: #{patch_embed_2d.1} parent=5 // pred_fallthru
        _
      %p295 = scmp.le.s32.totalorder 2, %s12
      // Predicated region
      $region37: #{patch_embed_2d.1} parent=5 // pred_check
        %p296 = pneg %p295
      $region38: #{patch_embed_2d.1} parent=5 // pred_check_branch
        %298 = sbr.rel (%p296) target = $region40
      $region39: #{patch_embed_2d.1} parent=5 // pred_region
        %s299 = ssub.s32 %s12, 2
        // Predicated region
        $region41: #{patch_embed_2d.1} parent=39 // pred_check
          %p300 = pneg %p109
        $region42: #{patch_embed_2d.1} parent=39 // pred_check_branch
          %302 = sbr.rel (%p300) target = $region44
        $region43: #{patch_embed_2d.1} parent=39 // pred_region
          %s303 = sand.u32 %s94, 1
          %s304 = scalar_lea.sflag [#allocation3], %s303
          %s305 = sand.u32 %s94, 1
          %s306 = smul.addr %s305, 16
          %s307 = scalar_lea.vmem [#allocation2], %s306
          %308 = dma.done %s304, 256
        $region44: #{patch_embed_2d.1} parent=39 // pred_fallthru
          _
      $region40: #{patch_embed_2d.1} parent=5 // pred_fallthru
        _
    $region6: #{patch_embed_2d.1} parent=1 // loop_footer
      %s16 = sadd.s32 1, %s12
    $region7: #{patch_embed_2d.1} parent=1 // loop_footer_branch
      %11 = sbr.rel target = $region3
    $region8: #{patch_embed_2d.1} parent=1 // loop_exit
      _
    %309 = vsyncpa [#allocation3], 1
    %s310 = scalar_lea.sflag [#allocation3], 1
    %311 = vsyncpa %s310, 1

</llo_original>
